<compile_context>
chip_gen: v7x
topology: tpu7x:2x2x1
jax: 0.10.0
libtpu: 0.0.40
codegen_flags: <defaults>
</compile_context>

<pallas_src>
import functools

import jax
import jax.numpy as jnp
from jax.experimental import pallas as pl
from jax.experimental.pallas import tpu as pltpu


def _line_conv_kernel(x_ref, a_ref, b_ref, o_ref, *, negative_slope):
    """Fused 3-tap line-GEMM conv + folded BN bias + LeakyReLU.

    x_ref: (1, H+2p, (W+2p)*C)  bf16  padded input rows for one image
    a_ref: (KH, (W+2p)*C, W*OC) bf16  per-row-tap line-GEMM weights (resident)
    b_ref: (1, W*OC)            f32   folded conv+BN bias tiled over W (resident)
    o_ref: (H, W*OC)            f32   lane-dense output rows for one image
    """
    kh_taps = a_ref.shape[0]
    n_rows = o_ref.shape[0]

    x_all = x_ref[0]                                   # (Hp, WpC) bf16
    acc = jnp.zeros(o_ref.shape, jnp.float32)
    for kh in range(kh_taps):                          # static unroll, KH = 3
        acc += jnp.dot(x_all[kh:kh + n_rows, :], a_ref[kh],
                       preferred_element_type=jnp.float32)

    z = acc + b_ref[...]                               # f32 epilogue
    o_ref[...] = jnp.maximum(z, negative_slope * z).astype(o_ref.dtype)


def simple_conv(x, conv_w, conv_b, bn_gamma, bn_beta, bn_mean, bn_var,
                *, eps=1e-5, negative_slope=0.01, compute_dtype=jnp.bfloat16):
    """Forward of SimpleConv.

    x:       (B, C, H, W) float32 (NCHW, like PyTorch)
    conv_w:  (OC, C, KH, KW)   conv_b: (OC,)
    bn_*:    (OC,) BatchNorm2d affine params + running stats (eval mode).
    Returns: (B, OC, H, W) float32.
    """
    B, C, H, W = x.shape
    OC, C_w, KH, KW = conv_w.shape
    assert C_w == C and KH == KW and KH % 2 == 1
    pad = KH // 2
    Hp, Wp = H + 2 * pad, W + 2 * pad
    WOC = W * OC
    WpC = Wp * C

    # ---- Fold BatchNorm (eval mode) into conv weight / bias -----------------
    # TODO(synk): training-mode BatchNorm (batch statistics + running-stat
    # update) is not implemented; eval-mode running stats are used.
    scale = bn_gamma / jnp.sqrt(bn_var + eps)                  # (OC,)
    w_fold = conv_w * scale[:, None, None, None]               # (OC,C,KH,KW)
    b_fold = (conv_b - bn_mean) * scale + bn_beta              # (OC,)

    # ---- Build the KH line-GEMM weights (tiny, done once in XLA) ------------
    #   A[kh, (w+kw)*C + c, w*OC + oc] = w_fold[oc, c, kh, kw]
    w_t = jnp.transpose(w_fold, (2, 3, 1, 0))                  # (KH,KW,C,OC)
    eye = jnp.eye(W, dtype=w_fold.dtype)
    shifts = jnp.stack([jnp.pad(eye, ((kw, Wp - W - kw), (0, 0)))
                        for kw in range(KW)])                  # (KW,Wp,W)
    a_mats = jnp.einsum('kiw,hkco->hicwo', shifts, w_t)        # (KH,Wp,C,W,OC)
    a_mats = a_mats.reshape(KH, WpC, WOC).astype(compute_dtype)

    bias_row = jnp.tile(b_fold, W).reshape(1, WOC).astype(jnp.float32)

    # ---- Activations: padded NHWC rows, no im2col in HBM --------------------
    x_nhwc = jnp.transpose(x, (0, 2, 3, 1))                    # (B,H,W,C)
    x_rows = jnp.pad(x_nhwc, ((0, 0), (pad, pad), (pad, pad), (0, 0)))
    x_rows = x_rows.reshape(B, Hp, WpC).astype(compute_dtype)  # (B,Hp,Wp*C)

    kernel = functools.partial(_line_conv_kernel,
                               negative_slope=negative_slope)

    flops = 2 * B * H * KH * WpC * WOC
    bytes_accessed = (B * Hp * WpC * 2            # bf16 activations
                      + KH * WpC * WOC * 2        # bf16 line-GEMM weights
                      + WOC * 4                   # f32 bias
                      + B * H * WOC * 4)          # f32 output

    out_rows = pl.pallas_call(
        kernel,
        out_shape=jax.ShapeDtypeStruct((B * H, WOC), jnp.float32),
        grid_spec=pltpu.PrefetchScalarGridSpec(
            num_scalar_prefetch=0,
            grid=(B,),                                          # even -> v7x megacore
            in_specs=[
                pl.BlockSpec((1, Hp, WpC), lambda b: (b, 0, 0)),   # per-image rows
                pl.BlockSpec((KH, WpC, WOC), lambda b: (0, 0, 0)),  # resident weights
                pl.BlockSpec((1, WOC), lambda b: (0, 0)),           # resident bias
            ],
            out_specs=pl.BlockSpec((H, WOC), lambda b: (b, 0)),     # lane-dense rows
        ),
        compiler_params=pltpu.CompilerParams(
            dimension_semantics=("parallel",),
        ),
        cost_estimate=pl.CostEstimate(
            flops=flops, transcendentals=0, bytes_accessed=bytes_accessed),
    )(x_rows, a_mats, bias_row)

    out = out_rows.reshape(B, H, W, OC)
    return jnp.transpose(out, (0, 3, 1, 2))                     # NCHW


def _reference(x, conv_w, conv_b, gamma, beta, mean, var,
               eps=1e-5, negative_slope=0.01):
    pad = conv_w.shape[-1] // 2
    y = jax.lax.conv_general_dilated(
        x, conv_w, window_strides=(1, 1),
        padding=((pad, pad), (pad, pad)),
        dimension_numbers=("NCHW", "OIHW", "NCHW"))
    y = y + conv_b[None, :, None, None]
    y = (y - mean[None, :, None, None]) / jnp.sqrt(var[None, :, None, None] + eps)
    y = y * gamma[None, :, None, None] + beta[None, :, None, None]
    return jnp.maximum(y, negative_slope * y)


if __name__ == "__main__":
    key = jax.random.PRNGKey(0)
    ks = jax.random.split(key, 7)

    # Small shapes consistent with the module: B=2, in_c=4, out_c=8, H=W=16, k=3.
    B, C, H, W = 2, 4, 16, 16
    OC, KS = 8, 3

    x = jax.random.normal(ks[0], (B, C, H, W), dtype=jnp.float32)

    bound = 1.0 / (C * KS * KS) ** 0.5          # PyTorch Conv2d default init bound
    conv_w = jax.random.uniform(ks[1], (OC, C, KS, KS), minval=-bound,
                                maxval=bound, dtype=jnp.float32)
    conv_b = jax.random.uniform(ks[2], (OC,), minval=-bound, maxval=bound,
                                dtype=jnp.float32)
    bn_gamma = jax.random.uniform(ks[3], (OC,), minval=0.5, maxval=1.5,
                                  dtype=jnp.float32)
    bn_beta = 0.1 * jax.random.normal(ks[4], (OC,), dtype=jnp.float32)
    bn_mean = 0.1 * jax.random.normal(ks[5], (OC,), dtype=jnp.float32)
    bn_var = jax.random.uniform(ks[6], (OC,), minval=0.5, maxval=1.5,
                                dtype=jnp.float32)

    out = simple_conv(x, conv_w, conv_b, bn_gamma, bn_beta, bn_mean, bn_var)
    out = jax.block_until_ready(out)

    ref = _reference(x, conv_w, conv_b, bn_gamma, bn_beta, bn_mean, bn_var)
    assert out.shape == (B, OC, H, W)
    # bf16 MXU operands with f32 accumulation -> looser tolerance than pure f32.
    err = float(jnp.max(jnp.abs(out - ref)))
    assert jnp.allclose(out, ref, atol=2e-2, rtol=2e-2), f"max |err| = {err}"

    print("KERNEL_OK")
</pallas_src>

<mosaic_0001>
module attributes {stable_mosaic.version = 11 : i64} {
  func.func @_line_conv_kernel(%arg0: i32, %arg1: memref<1x18x72xbf16, #tpu.memory_space<vmem>>, %arg2: memref<3x72x128xbf16, #tpu.memory_space<vmem>>, %arg3: memref<1x128xf32, #tpu.memory_space<vmem>>, %arg4: memref<16x128xf32, #tpu.memory_space<vmem>>) attributes {dimension_semantics = [#tpu.dimension_semantics<parallel>], iteration_bounds = array<i64: 2>, scalar_prefetch = 0 : i64, scratch_operands = 0 : i64, tpu.core_type = #tpu.core_type<tc>, window_params = [{transform_indices = @transform_0, window_bounds = array<i64: 1, 18, 72>}, {pipeline_mode = #tpu.pipeline_mode<synchronous>, transform_indices = @transform_1, window_bounds = array<i64: 3, 72, 128>}, {pipeline_mode = #tpu.pipeline_mode<synchronous>, transform_indices = @transform_2, window_bounds = array<i64: 1, 128>}, {transform_indices = @transform_3, window_bounds = array<i64: 16, 128>}]} {
    %c0 = arith.constant 0 : index
    %c0_0 = arith.constant 0 : index
    %c0_1 = arith.constant 0 : index
    %0 = vector.load %arg1[%c0, %c0_0, %c0_1] : memref<1x18x72xbf16, #tpu.memory_space<vmem>>, vector<1x18x72xbf16>
    %1 = vector.shape_cast %0 : vector<1x18x72xbf16> to vector<18x72xbf16>
    %cst = arith.constant 0.000000e+00 : f32
    %2 = vector.broadcast %cst : f32 to vector<16x128xf32>
    %3 = vector.extract_strided_slice %1 {offsets = [0, 0], sizes = [16, 72], strides = [1, 1]} : vector<18x72xbf16> to vector<16x72xbf16>
    %c0_2 = arith.constant 0 : index
    %c0_3 = arith.constant 0 : index
    %c0_4 = arith.constant 0 : index
    %4 = vector.load %arg2[%c0_2, %c0_3, %c0_4] : memref<3x72x128xbf16, #tpu.memory_space<vmem>>, vector<1x72x128xbf16>
    %5 = vector.shape_cast %4 : vector<1x72x128xbf16> to vector<72x128xbf16>
    %cst_5 = arith.constant dense<0.000000e+00> : vector<16x128xf32>
    %6 = tpu.matmul %3, %5, %cst_5 {dimension_numbers = #tpu.dot_dimension_numbers<[1], [0], [0], [1], [0, 0, 1, 1], [], []>} : vector<16x72xbf16>, vector<72x128xbf16>, vector<16x128xf32> -> vector<16x128xf32>
    %7 = arith.addf %2, %6 : vector<16x128xf32>
    %8 = vector.extract_strided_slice %1 {offsets = [1, 0], sizes = [16, 72], strides = [1, 1]} : vector<18x72xbf16> to vector<16x72xbf16>
    %c1 = arith.constant 1 : index
    %c0_6 = arith.constant 0 : index
    %c0_7 = arith.constant 0 : index
    %9 = vector.load %arg2[%c1, %c0_6, %c0_7] : memref<3x72x128xbf16, #tpu.memory_space<vmem>>, vector<1x72x128xbf16>
    %10 = vector.shape_cast %9 : vector<1x72x128xbf16> to vector<72x128xbf16>
    %cst_8 = arith.constant dense<0.000000e+00> : vector<16x128xf32>
    %11 = tpu.matmul %8, %10, %cst_8 {dimension_numbers = #tpu.dot_dimension_numbers<[1], [0], [0], [1], [0, 0, 1, 1], [], []>} : vector<16x72xbf16>, vector<72x128xbf16>, vector<16x128xf32> -> vector<16x128xf32>
    %12 = arith.addf %7, %11 : vector<16x128xf32>
    %13 = vector.extract_strided_slice %1 {offsets = [2, 0], sizes = [16, 72], strides = [1, 1]} : vector<18x72xbf16> to vector<16x72xbf16>
    %c2 = arith.constant 2 : index
    %c0_9 = arith.constant 0 : index
    %c0_10 = arith.constant 0 : index
    %14 = vector.load %arg2[%c2, %c0_9, %c0_10] : memref<3x72x128xbf16, #tpu.memory_space<vmem>>, vector<1x72x128xbf16>
    %15 = vector.shape_cast %14 : vector<1x72x128xbf16> to vector<72x128xbf16>
    %cst_11 = arith.constant dense<0.000000e+00> : vector<16x128xf32>
    %16 = tpu.matmul %13, %15, %cst_11 {dimension_numbers = #tpu.dot_dimension_numbers<[1], [0], [0], [1], [0, 0, 1, 1], [], []>} : vector<16x72xbf16>, vector<72x128xbf16>, vector<16x128xf32> -> vector<16x128xf32>
    %17 = arith.addf %12, %16 : vector<16x128xf32>
    %c0_12 = arith.constant 0 : index
    %c0_13 = arith.constant 0 : index
    %18 = vector.load %arg3[%c0_12, %c0_13] : memref<1x128xf32, #tpu.memory_space<vmem>>, vector<1x128xf32>
    %19 = vector.broadcast %18 : vector<1x128xf32> to vector<16x128xf32>
    %20 = arith.addf %17, %19 : vector<16x128xf32>
    %cst_14 = arith.constant 0.00999999977 : f32
    %21 = vector.broadcast %cst_14 : f32 to vector<16x128xf32>
    %22 = arith.mulf %21, %20 : vector<16x128xf32>
    %23 = arith.maximumf %20, %22 : vector<16x128xf32>
    %c0_15 = arith.constant 0 : index
    %c0_16 = arith.constant 0 : index
    %24 = vector.load %arg4[%c0_15, %c0_16] : memref<16x128xf32, #tpu.memory_space<vmem>>, vector<16x128xf32>
    tpu.vector_store %arg4[%c0_15, %c0_16], %23 {strides = array<i32>} : memref<16x128xf32, #tpu.memory_space<vmem>>, vector<16x128xf32>,
    return
  }
  func.func @transform_0(%arg0: i32) -> (i32, i32, i32) {
    %c0_i32 = arith.constant 0 : i32
    %c0_i32_0 = arith.constant 0 : i32
    %c0_i32_1 = arith.constant 0 : i32
    return %arg0, %c0_i32, %c0_i32_0 : i32, i32, i32
  }
  func.func @transform_1(%arg0: i32) -> (i32, i32, i32) {
    %c0_i32 = arith.constant 0 : i32
    %c0_i32_0 = arith.constant 0 : i32
    %c0_i32_1 = arith.constant 0 : i32
    %c0_i32_2 = arith.constant 0 : i32
    return %c0_i32, %c0_i32_0, %c0_i32_1 : i32, i32, i32
  }
  func.func @transform_2(%arg0: i32) -> (i32, i32) {
    %c0_i32 = arith.constant 0 : i32
    %c0_i32_0 = arith.constant 0 : i32
    %c0_i32_1 = arith.constant 0 : i32
    return %c0_i32, %c0_i32_0 : i32, i32
  }
  func.func @transform_3(%arg0: i32) -> (i32, i32) {
    %c0_i32 = arith.constant 0 : i32
    %c0_i32_0 = arith.constant 0 : i32
    return %arg0, %c0_i32 : i32, i32
  }
}

</mosaic_0001>

<llo_original>
// kernel: tpu_custom_call.1
$region0: #{tpu_custom_call.1}
  #allocation0 [shape = 'u32[]', space=smem, size = 0x4, offset = 0x4, fixed_abs, tag = 'smem constant byte address 0x4 - core index']
  #allocation1 [shape = 'u32[144,128]{1,0:T(1,128)}', space=vmem, size = 0x12000, scoped, tag = 'internal scratch']
  %s0 = inlined_call_operand.vmem [shape: bf16[2,18,72], index: 0, kind: input, shape index: {}]
  %s1 = inlined_call_operand.hbm [shape: bf16[3,72,128], index: 1, kind: input, shape index: {}]
  %s2 = inlined_call_operand.vmem [shape: f32[1,128], index: 2, kind: input, shape index: {}]
  %s3 = inlined_call_operand.hbm [shape: f32[32,128], index: 3, kind: output, shape index: {}]
  %s4 = sld [smem:[#allocation0]]
  $region49: #{tpu_custom_call.1} parent=0
    _
  %s6 = ssub.s32 1, %s4
  %s7 = scalar_select 0, %s6, %s4
  $region1: #{tpu_custom_call.1} parent=0
    #allocation2 [shape = 'u8[55296]{0}', space=vmem, size = 0xd800, scoped, tag = 'input window, operand 1, single buffered']
    #allocation3 [shape = 's32[2]{0}', space=sflag, size = 0x8, scoped, tag = 'scoped memory for tpu_custom_call.1']
    #allocation4 [shape = 's32[2]{0}', space=sflag, size = 0x8, scoped, tag = 'scoped memory for tpu_custom_call.1']
    #allocation5 [shape = 'u8[16384]{0}', space=vmem, size = 0x4000, scoped, tag = 'output window, operand 0']
    %8 = vsyncpa [#allocation3], 0
    %9 = vsyncpa [#allocation4], 0
    %s10 = scalar_lea.sflag [#allocation4], 1
    %11 = vsyncpa %s10, 0
    loop: start=0, step=1, limit=4
    $region2: #{tpu_custom_call.1} parent=1 // loop_pre_header
      _
    $region3: #{tpu_custom_call.1} parent=1 // loop_header
      %s13 = sphi 0, %s17
      %p14 = scmp.ge.s32.totalorder %s13, 4
      %s23 = sphi 0, %s25
      %s26 = sphi 0, %s23
      %s27 = sphi 0, %s26
      %s43 = sphi 0, %s27
      %s47 = sphi 0, %s47
      %s49 = sphi 0, %s47
      %s50 = sphi 0, %s49
      %s64 = sphi 0, %s50
      %s68 = sphi 0, %s68
      %s70 = sphi 0, %s68
      %s71 = sphi 0, %s70
      %s85 = sphi 0, %s71
      %s91 = sphi 0, %s93
      %s94 = sphi 0, %s91
      %s95 = sphi 0, %s94
      %s111 = sphi 0, %s95
    $region4: #{tpu_custom_call.1} parent=1 // loop_header_branch
      %16 = sbr.rel (%p14) target = $region8
    $region5: #{tpu_custom_call.1} parent=1 // loop_body
      %s18 = ssub.s32 %s13, 1
      %s19 = ssub.s32 %s13, 2
      %s20 = sadd.s32 %s13, 1
      %s21 = ssub.s32 %s13, %s20
      %p22 = scmp.eq.s32.totalorder %s21, 0
      %s24 = sadd.s32 %s23, 1
      %s25 = scalar_select %p22, %s23, %s24
      %p28 = pneg %p22
      %p29 = scmp.eq.s32.totalorder %s13, 1
      %p30 = por %p28, %p29
      %p31 = scmp.ne.s32.totalorder %s23, %s26
      %p32 = scmp.eq.s32.totalorder %s13, 0
      %p33 = por %p31, %p32
      %p34 = scmp.ne.s32.totalorder %s23, %s26
      %p35 = scmp.eq.s32.totalorder %s18, 1
      %p36 = por %p34, %p35
      %p37 = scmp.ne.s32.totalorder %s26, %s27
      %p38 = scmp.eq.s32.totalorder %s18, 0
      %p39 = por %p37, %p38
      %p40 = scmp.ne.s32.totalorder %s26, %s27
      %p41 = scmp.eq.s32.totalorder %s19, 1
      %p42 = por %p40, %p41
      %p44 = scmp.ne.s32.totalorder %s27, %s43
      %p45 = scmp.eq.s32.totalorder %s19, 0
      %p46 = por %p44, %p45
      %s48 = sadd.s32 %s47, 1
      %p51 = scmp.eq.s32.totalorder %s13, 1
      %p52 = scmp.ne.s32.totalorder %s47, %s49
      %p53 = scmp.eq.s32.totalorder %s13, 0
      %p54 = por %p52, %p53
      %p55 = scmp.ne.s32.totalorder %s47, %s49
      %p56 = scmp.eq.s32.totalorder %s18, 1
      %p57 = por %p55, %p56
      %p58 = scmp.ne.s32.totalorder %s49, %s50
      %p59 = scmp.eq.s32.totalorder %s18, 0
      %p60 = por %p58, %p59
      %p61 = scmp.ne.s32.totalorder %s49, %s50
      %p62 = scmp.eq.s32.totalorder %s19, 1
      %p63 = por %p61, %p62
      %p65 = scmp.ne.s32.totalorder %s50, %s64
      %p66 = scmp.eq.s32.totalorder %s19, 0
      %p67 = por %p65, %p66
      %s69 = sadd.s32 %s68, 1
      %p72 = scmp.eq.s32.totalorder %s13, 1
      %p73 = scmp.ne.s32.totalorder %s68, %s70
      %p74 = scmp.eq.s32.totalorder %s13, 0
      %p75 = por %p73, %p74
      %p76 = scmp.ne.s32.totalorder %s68, %s70
      %p77 = scmp.eq.s32.totalorder %s18, 1
      %p78 = por %p76, %p77
      %p79 = scmp.ne.s32.totalorder %s70, %s71
      %p80 = scmp.eq.s32.totalorder %s18, 0
      %p81 = por %p79, %p80
      %p82 = scmp.ne.s32.totalorder %s70, %s71
      %p83 = scmp.eq.s32.totalorder %s19, 1
      %p84 = por %p82, %p83
      %p86 = scmp.ne.s32.totalorder %s71, %s85
      %p87 = scmp.eq.s32.totalorder %s19, 0
      %p88 = por %p86, %p87
      %s89 = ssub.s32 %s13, %s20
      %p90 = scmp.eq.s32.totalorder %s89, 0
      %s92 = sadd.s32 %s91, 1
      %s93 = scalar_select %p90, %s91, %s92
      %p96 = pneg %p90
      %p97 = scmp.eq.s32.totalorder %s13, 1
      %p98 = por %p96, %p97
      %p99 = scmp.ne.s32.totalorder %s91, %s94
      %p100 = scmp.eq.s32.totalorder %s13, 0
      %p101 = por %p99, %p100
      %p102 = scmp.ne.s32.totalorder %s91, %s94
      %p103 = scmp.eq.s32.totalorder %s18, 1
      %p104 = por %p102, %p103
      %p105 = scmp.ne.s32.totalorder %s94, %s95
      %p106 = scmp.eq.s32.totalorder %s18, 0
      %p107 = por %p105, %p106
      %p108 = scmp.ne.s32.totalorder %s94, %s95
      %p109 = scmp.eq.s32.totalorder %s19, 1
      %p110 = por %p108, %p109
      %p112 = scmp.ne.s32.totalorder %s95, %s111
      %p113 = scmp.eq.s32.totalorder %s19, 0
      %p114 = por %p112, %p113
      %p115 = scmp.le.s32.totalorder 1, %s13
      %p116 = scmp.lt.s32.totalorder %s13, 3
      %p117 = pnand %p115, %p116
      %p118 = pneg %p117
      // Predicated region
      $region9: #{tpu_custom_call.1} parent=5 // pred_check
        _
      $region10: #{tpu_custom_call.1} parent=5 // pred_check_branch
        %120 = sbr.rel (%p117) target = $region12
      $region11: #{tpu_custom_call.1} parent=5 // pred_region
        %s121 = ssub.s32 %s13, 1
        // Predicated region
        $region13: #{tpu_custom_call.1} parent=11 // pred_check
          %p122 = pneg %p60
        $region14: #{tpu_custom_call.1} parent=11 // pred_check_branch
          %124 = sbr.rel (%p122) target = $region16
        $region15: #{tpu_custom_call.1} parent=11 // pred_region
          %s126 = ssub.s32 1728, 1728
          %127 = vsyncadd [#allocation3], %s126
          %s128 = sshll.u32 [#allocation2], 4
          %s129 = int_to_ptr.vmem [resolvable:$true] %s128
          %134 = dma.hbm_to_vmem [thread:$0]  %s1, 1728, %s129, [#allocation3], 64, 64, 4
        $region16: #{tpu_custom_call.1} parent=11 // pred_fallthru
          _
        // Predicated region
        $region17: #{tpu_custom_call.1} parent=11 // pred_check
          %p135 = pneg %p81
        $region18: #{tpu_custom_call.1} parent=11 // pred_check_branch
          %137 = sbr.rel (%p135) target = $region20
        $region19: #{tpu_custom_call.1} parent=11 // pred_region
          _
        $region20: #{tpu_custom_call.1} parent=11 // pred_fallthru
          _
      $region12: #{tpu_custom_call.1} parent=5 // pred_fallthru
        _
      %p138 = scmp.lt.s32.totalorder %s13, 2
      // Predicated region
      $region21: #{tpu_custom_call.1} parent=5 // pred_check
        %p139 = pneg %p138
      $region22: #{tpu_custom_call.1} parent=5 // pred_check_branch
        %141 = sbr.rel (%p139) target = $region24
      $region23: #{tpu_custom_call.1} parent=5 // pred_region
        // Predicated region
        $region25: #{tpu_custom_call.1} parent=23 // pred_check
          %p142 = pneg %p33
        $region26: #{tpu_custom_call.1} parent=23 // pred_check_branch
          %144 = sbr.rel (%p142) target = $region28
        $region27: #{tpu_custom_call.1} parent=23 // pred_region
          %p145 = scmp.lt.s32.totalorder %s13, 1
          %s146 = scalar_select %p145, %s13, 1
          %s147 = smul.addr %s146, 3
          %s148 = smul.addr %s147, 4
          %s149 = scalar_lea.vmem %s0, %s148
        $region28: #{tpu_custom_call.1} parent=23 // pred_fallthru
          _
      $region24: #{tpu_custom_call.1} parent=5 // pred_fallthru
        _
      %p150 = scmp.le.s32.totalorder 1, %s13
      %p151 = scmp.lt.s32.totalorder %s13, 3
      %p152 = pnand %p150, %p151
      %p153 = pneg %p152
      // Predicated region
      $region29: #{tpu_custom_call.1} parent=5 // pred_check
        _
      $region30: #{tpu_custom_call.1} parent=5 // pred_check_branch
        %155 = sbr.rel (%p152) target = $region32
      $region31: #{tpu_custom_call.1} parent=5 // pred_region
        %s156 = ssub.s32 %s13, 1
        // Predicated region
        $region33: #{tpu_custom_call.1} parent=31 // pred_check
          %p157 = pneg %p60
        $region34: #{tpu_custom_call.1} parent=31 // pred_check_branch
          %159 = sbr.rel (%p157) target = $region36
        $region35: #{tpu_custom_call.1} parent=31 // pred_region
          %160 = dma.done [#allocation3], 1728
        $region36: #{tpu_custom_call.1} parent=31 // pred_fallthru
          _
        %p161 = scmp.lt.s32.totalorder %s18, 1
        %s162 = scalar_select %p161, %s18, 1
        %s163 = smul.addr %s162, 3
        %s164 = smul.addr %s163, 4
        %s165 = scalar_lea.vmem %s0, %s164
        %p166 = pneg %p39
        %p167 = pneg %p36
        %p168 = pneg %p60
        %p169 = pneg %p57
        %p170 = pneg %p81
        %p171 = pneg %p78
        %p172 = pneg %p107
        %p173 = pneg %p104
        %s174 = sand.u32 %s94, 1
        %s175 = scalar_lea.sflag [#allocation4], %s174
        %s176 = sand.u32 %s94, 1
        %s177 = smul.addr %s176, 16
        %s178 = scalar_lea.vmem [#allocation5], %s177
        %p179 = scmp.lt.s32.totalorder %s18, 1
        %s180 = scalar_select %p179, %s18, 1
        %s181 = smul.addr %s180, 3
        %s182 = smul.addr %s181, 4
        %s183 = scalar_lea.vmem %s0, %s182
        %s184 = smul.u32 2, %s18
        %v186 = vld [vmem:[%s183] sm:$0xf]
        %v187 = vld [vmem:[%s183 + $0x4] sm:$0xf]
        %v188 = vld [vmem:[%s183 + $0x8] sm:$0x1]
        %v189 = vld [vmem:[#allocation2] sm:$0xf]
        %v190 = vld [vmem:[#allocation2 + $0x4] sm:$0xf]
        %v191 = vld [vmem:[#allocation2 + $0x8] sm:$0xf]
        %v192 = vld [vmem:[#allocation2 + $0xc] sm:$0xf]
        %v193 = vld [vmem:[#allocation2 + $0x10] sm:$0xf]
        %v194 = vld [vmem:[#allocation2 + $0x14] sm:$0xf]
        %v195 = vld [vmem:[#allocation2 + $0x18] sm:$0xf]
        %v196 = vld [vmem:[#allocation2 + $0x1c] sm:$0xf]
        %v197 = vld [vmem:[#allocation2 + $0x20] sm:$0xf]
        %s198 = scalar_lea.vmem [#allocation2], 36
        %v199 = vld [vmem:[%s198] sm:$0xf]
        %v200 = vld [vmem:[%s198 + $0x4] sm:$0xf]
        %v201 = vld [vmem:[%s198 + $0x8] sm:$0xf]
        %v202 = vld [vmem:[%s198 + $0xc] sm:$0xf]
        %v203 = vld [vmem:[%s198 + $0x10] sm:$0xf]
        %v204 = vld [vmem:[%s198 + $0x14] sm:$0xf]
        %v205 = vld [vmem:[%s198 + $0x18] sm:$0xf]
        %v206 = vld [vmem:[%s198 + $0x1c] sm:$0xf]
        %v207 = vld [vmem:[%s198 + $0x20] sm:$0xf]
        %v211 = vunpack.c.l.b16 %v186
        %v212 = vunpack.c.l.b16 %v187
        %v213 = vunpack.c.l.b16 %v188
        %v214 = vpack.c.b16 %v212, %v211
        %v215 = vpack.c.b16 %v213, %v213
        %vm216 = vsmask.f32 7424
        %v218 = vshrl.u32 %v214, 16
        %v220 = vshll.u32 %v214, 16
        %v222 = vrot.slane %v220, 1
        %v223 = vor.u32 %v218, %v222
        %v225 = vshll.u32 %v215, 16
        %v227 = vrot.slane %v225, 1
        %v228 = vsel %vm216, %v223, %v227
        %v238 = vunpack.c.l.b16 %v199
        %v239 = vunpack.c.l.b16 %v200
        %v240 = vunpack.c.l.b16 %v201
        %v241 = vunpack.c.l.b16 %v202
        %v242 = vunpack.c.l.b16 %v203
        %v243 = vunpack.c.l.b16 %v204
        %v244 = vunpack.c.l.b16 %v205
        %v245 = vunpack.c.l.b16 %v206
        %v246 = vunpack.c.l.b16 %v207
        %v247 = vpack.c.b16 %v239, %v238
        %v248 = vpack.c.b16 %v241, %v240
        %v249 = vpack.c.b16 %v243, %v242
        %v250 = vpack.c.b16 %v245, %v244
        %v251 = vpack.c.b16 %v246, %v246
        %vm256 = vcmask 588800
        %v258 = vsel %vm256, %v228, 0
        %vm260 = vcmask 1043456
        %v262 = vsel %vm260, %v251, 0
        %264 = vmatprep.subr.bf16.mxu0 0
        %265 = vmatpush1.bf16.msra.mxu0 %v247
        %266 = vmatprep.subr.bf16.mxu0 0
        %267 = vmatpush1.bf16.msra.mxu0 %v248
        %268 = vmatprep.subr.bf16.mxu0 0
        %269 = vmatpush1.bf16.msra.mxu0 %v249
        %270 = vmatprep.subr.bf16.mxu0 0
        %271 = vmatpush1.bf16.msra.mxu0 %v250
        %272 = vmatprep.subr.bf16.mxu0 0
        %273 = vmatpush1.bf16.msra.mxu0 %v262
        %274 = vmatprep.subr.bf16.mxu0 0
        %275 = vmatpush1.bf16.msra.mxu0 0
        %276 = vmatprep.subr.bf16.mxu0 0
        %277 = vmatpush1.bf16.msra.mxu0 0
        %278 = vmatprep.subr.bf16.mxu0 0
        %279 = vmatpush1.bf16.msra.mxu0 0
        %280 = vmatprep.subr.bf16.mxu0 0
        %281 = vmatpush1.bf16.msra.mxu0 0
        %282 = vmatprep.subr.bf16.mxu0 0
        %283 = vmatpush1.bf16.msra.mxu0 0
        %284 = vmatprep.subr.bf16.mxu0 0
        %285 = vmatpush1.bf16.msra.mxu0 0
        %286 = vmatprep.subr.bf16.mxu0 0
        %287 = vmatpush1.bf16.msra.mxu0 0
        %288 = vmatprep.subr.bf16.mxu0 0
        %289 = vmatpush1.bf16.msra.mxu0 0
        %290 = vmatprep.subr.bf16.mxu0 0
        %291 = vmatpush1.bf16.msra.mxu0 0
        %292 = vmatprep.subr.bf16.mxu0 0
        %293 = vmatpush1.bf16.msra.mxu0 0
        %294 = vmatprep.subr.bf16.mxu0 0
        %295 = vmatpush1.bf16.msra.mxu0 0
        %296 = vmatprep.mubr.bf16.mxu0 0
        %297 = vmatmul.mubr.bf16.gmra.mrb[0].mxu0 %v258
        %v298 = vpop.f32.mrb[0].mxu0
        %v299 = vadd.f32 0.0, %v298
        %v300 = vpop.f32.mrb[0].mxu0
        %v301 = vpop.f32.mrb[0].mxu0
        %v302 = vadd.f32 0.0, %v301
        %v303 = vpop.f32.mrb[0].mxu0
        %304 = vdwg.mxu0
        %v314 = vunpack.c.l.b16 %v189
        %v315 = vunpack.c.l.b16 %v190
        %v316 = vunpack.c.l.b16 %v191
        %v317 = vunpack.c.l.b16 %v192
        %v318 = vunpack.c.l.b16 %v193
        %v319 = vunpack.c.l.b16 %v194
        %v320 = vunpack.c.l.b16 %v195
        %v321 = vunpack.c.l.b16 %v196
        %v322 = vunpack.c.l.b16 %v197
        %v323 = vpack.c.b16 %v315, %v314
        %v324 = vpack.c.b16 %v317, %v316
        %v325 = vpack.c.b16 %v319, %v318
        %v326 = vpack.c.b16 %v321, %v320
        %v327 = vpack.c.b16 %v322, %v322
        %v332 = vsel %vm256, %v214, 0
        %v335 = vsel %vm260, %v327, 0
        %337 = vmatprep.subr.bf16.mxu0 0
        %338 = vmatpush1.bf16.msra.mxu0 %v323
        %339 = vmatprep.subr.bf16.mxu0 0
        %340 = vmatpush1.bf16.msra.mxu0 %v324
        %341 = vmatprep.subr.bf16.mxu0 0
        %342 = vmatpush1.bf16.msra.mxu0 %v325
        %343 = vmatprep.subr.bf16.mxu0 0
        %344 = vmatpush1.bf16.msra.mxu0 %v326
        %345 = vmatprep.subr.bf16.mxu0 0
        %346 = vmatpush1.bf16.msra.mxu0 %v335
        %347 = vmatprep.subr.bf16.mxu0 0
        %348 = vmatpush1.bf16.msra.mxu0 0
        %349 = vmatprep.subr.bf16.mxu0 0
        %350 = vmatpush1.bf16.msra.mxu0 0
        %351 = vmatprep.subr.bf16.mxu0 0
        %352 = vmatpush1.bf16.msra.mxu0 0
        %353 = vmatprep.subr.bf16.mxu0 0
        %354 = vmatpush1.bf16.msra.mxu0 0
        %355 = vmatprep.subr.bf16.mxu0 0
        %356 = vmatpush1.bf16.msra.mxu0 0
        %357 = vmatprep.subr.bf16.mxu0 0
        %358 = vmatpush1.bf16.msra.mxu0 0
        %359 = vmatprep.subr.bf16.mxu0 0
        %360 = vmatpush1.bf16.msra.mxu0 0
        %361 = vmatprep.subr.bf16.mxu0 0
        %362 = vmatpush1.bf16.msra.mxu0 0
        %363 = vmatprep.subr.bf16.mxu0 0
        %364 = vmatpush1.bf16.msra.mxu0 0
        %365 = vmatprep.subr.bf16.mxu0 0
        %366 = vmatpush1.bf16.msra.mxu0 0
        %367 = vmatprep.subr.bf16.mxu0 0
        %368 = vmatpush1.bf16.msra.mxu0 0
        %369 = vmatprep.mubr.bf16.mxu0 0
        %370 = vmatmul.mubr.bf16.gmra.mrb[0].mxu0 %v332
        %v371 = vpop.f32.mrb[0].mxu0
        %v372 = vadd.f32 %v299, %v371
        %v373 = vpop.f32.mrb[0].mxu0
        %v374 = vpop.f32.mrb[0].mxu0
        %v375 = vadd.f32 %v302, %v374
        %v376 = vpop.f32.mrb[0].mxu0
        %377 = vdwg.mxu0
        %s378 = scalar_lea.vmem [#allocation2], 72
        %v379 = vld [vmem:[%s378] sm:$0xf]
        %v380 = vld [vmem:[%s378 + $0x4] sm:$0xf]
        %v381 = vld [vmem:[%s378 + $0x8] sm:$0xf]
        %v382 = vld [vmem:[%s378 + $0xc] sm:$0xf]
        %v383 = vld [vmem:[%s378 + $0x10] sm:$0xf]
        %v384 = vld [vmem:[%s378 + $0x14] sm:$0xf]
        %v385 = vld [vmem:[%s378 + $0x18] sm:$0xf]
        %v386 = vld [vmem:[%s378 + $0x1c] sm:$0xf]
        %v387 = vld [vmem:[%s378 + $0x20] sm:$0xf]
        %vm388 = vcmask 1046528
        %v389 = vrot.slane %v214, 1
        %v390 = vrot.slane %v215, 1
        %v391 = vsel %vm388, %v389, %v390
        %v401 = vunpack.c.l.b16 %v379
        %v402 = vunpack.c.l.b16 %v380
        %v403 = vunpack.c.l.b16 %v381
        %v404 = vunpack.c.l.b16 %v382
        %v405 = vunpack.c.l.b16 %v383
        %v406 = vunpack.c.l.b16 %v384
        %v407 = vunpack.c.l.b16 %v385
        %v408 = vunpack.c.l.b16 %v386
        %v409 = vunpack.c.l.b16 %v387
        %v410 = vpack.c.b16 %v402, %v401
        %v411 = vpack.c.b16 %v404, %v403
        %v412 = vpack.c.b16 %v406, %v405
        %v413 = vpack.c.b16 %v408, %v407
        %v414 = vpack.c.b16 %v409, %v409
        %v420 = vsel %vm256, %v391, 0
        %v423 = vsel %vm260, %v414, 0
        %425 = vmatprep.subr.bf16.mxu0 0
        %426 = vmatpush1.bf16.msra.mxu0 %v410
        %427 = vmatprep.subr.bf16.mxu0 0
        %428 = vmatpush1.bf16.msra.mxu0 %v411
        %429 = vmatprep.subr.bf16.mxu0 0
        %430 = vmatpush1.bf16.msra.mxu0 %v412
        %431 = vmatprep.subr.bf16.mxu0 0
        %432 = vmatpush1.bf16.msra.mxu0 %v413
        %433 = vmatprep.subr.bf16.mxu0 0
        %434 = vmatpush1.bf16.msra.mxu0 %v423
        %435 = vmatprep.subr.bf16.mxu0 0
        %436 = vmatpush1.bf16.msra.mxu0 0
        %437 = vmatprep.subr.bf16.mxu0 0
        %438 = vmatpush1.bf16.msra.mxu0 0
        %439 = vmatprep.subr.bf16.mxu0 0
        %440 = vmatpush1.bf16.msra.mxu0 0
        %441 = vmatprep.subr.bf16.mxu0 0
        %442 = vmatpush1.bf16.msra.mxu0 0
        %443 = vmatprep.subr.bf16.mxu0 0
        %444 = vmatpush1.bf16.msra.mxu0 0
        %445 = vmatprep.subr.bf16.mxu0 0
        %446 = vmatpush1.bf16.msra.mxu0 0
        %447 = vmatprep.subr.bf16.mxu0 0
        %448 = vmatpush1.bf16.msra.mxu0 0
        %449 = vmatprep.subr.bf16.mxu0 0
        %450 = vmatpush1.bf16.msra.mxu0 0
        %451 = vmatprep.subr.bf16.mxu0 0
        %452 = vmatpush1.bf16.msra.mxu0 0
        %453 = vmatprep.subr.bf16.mxu0 0
        %454 = vmatpush1.bf16.msra.mxu0 0
        %455 = vmatprep.subr.bf16.mxu0 0
        %456 = vmatpush1.bf16.msra.mxu0 0
        %457 = vmatprep.mubr.bf16.mxu0 0
        %458 = vmatmul.mubr.bf16.gmra.mrb[0].mxu0 %v420
        %v459 = vpop.f32.mrb[0].mxu0
        %v460 = vadd.f32 0.0, %v459
        %v461 = vpop.f32.mrb[0].mxu0
        %v462 = vpop.f32.mrb[0].mxu0
        %v463 = vadd.f32 0.0, %v462
        %v464 = vpop.f32.mrb[0].mxu0
        %465 = vdwg.mxu0
        %v466 = vadd.f32 %v372, %v460
        %v467 = vadd.f32 %v375, %v463
        %v468 = vld [vmem:[%s2] sm:$0x1]
        %v470 = vlaneseq
        %v471 = vshrl.u32 %v470, 7
        %v472 = vsub.s32 0, %v471
        %v473 = vrot.slane %v468, %v472
        %v475 = vadd.f32 %v466, %v473
        %v476 = vadd.f32 %v467, %v473
        %v477 = vmul.f32 %v475, 0.01
        %v478 = vmul.f32 %v476, 0.01
        %v479 = vmax.f32 %v475, %v477
        %v480 = vmax.f32 %v476, %v478
        %481 = vst [vmem:[%s178] sm:$0xff] %v479
        %482 = vst [vmem:[%s178 + $0x8] sm:$0xff] %v480
        %s483 = sand.u32 %s94, 1
        %s484 = scalar_lea.sflag [#allocation4], %s483
        %s485 = sand.u32 %s94, 1
        %s486 = smul.addr %s485, 16
        %s487 = scalar_lea.vmem [#allocation5], %s486
        // Predicated region
        $region37: #{tpu_custom_call.1} parent=31 // pred_check
          %p488 = pneg %p104
        $region38: #{tpu_custom_call.1} parent=31 // pred_check_branch
          %490 = sbr.rel (%p488) target = $region40
        $region39: #{tpu_custom_call.1} parent=31 // pred_region
          %s491 = smul.u32 2, %s18
          %s493 = ssub.s32 256, 256
          %494 = vsyncadd %s484, %s493
          %s495 = smul.addr %s491, 128
          %s496 = scalar_lea.hbm %s3, %s495
          %s497 = sshll.u32 %s487, 4
          %s498 = int_to_ptr.vmem [resolvable:$true] %s497
          %503 = dma.vmem_to_hbm [thread:$0]  %s498, 256, %s496, %s484, 128, 128, 8
        $region40: #{tpu_custom_call.1} parent=31 // pred_fallthru
          _
      $region32: #{tpu_custom_call.1} parent=5 // pred_fallthru
        _
      %p504 = scmp.le.s32.totalorder 2, %s13
      // Predicated region
      $region41: #{tpu_custom_call.1} parent=5 // pred_check
        %p505 = pneg %p504
      $region42: #{tpu_custom_call.1} parent=5 // pred_check_branch
        %507 = sbr.rel (%p505) target = $region44
      $region43: #{tpu_custom_call.1} parent=5 // pred_region
        %s508 = ssub.s32 %s13, 2
        // Predicated region
        $region45: #{tpu_custom_call.1} parent=43 // pred_check
          %p509 = pneg %p110
        $region46: #{tpu_custom_call.1} parent=43 // pred_check_branch
          %511 = sbr.rel (%p509) target = $region48
        $region47: #{tpu_custom_call.1} parent=43 // pred_region
          %s512 = sand.u32 %s95, 1
          %s513 = scalar_lea.sflag [#allocation4], %s512
          %s514 = sand.u32 %s95, 1
          %s515 = smul.addr %s514, 16
          %s516 = scalar_lea.vmem [#allocation5], %s515
          %517 = dma.done %s513, 256
        $region48: #{tpu_custom_call.1} parent=43 // pred_fallthru
          _
      $region44: #{tpu_custom_call.1} parent=5 // pred_fallthru
        _
    $region6: #{tpu_custom_call.1} parent=1 // loop_footer
      %s17 = sadd.s32 1, %s13
    $region7: #{tpu_custom_call.1} parent=1 // loop_footer_branch
      %12 = sbr.rel target = $region3
    $region8: #{tpu_custom_call.1} parent=1 // loop_exit
      _
    %518 = vsyncpa [#allocation3], 1
    %s519 = scalar_lea.sflag [#allocation3], 1
    %520 = vsyncpa %s519, 1
    %521 = vsyncpa [#allocation4], 1
    %s522 = scalar_lea.sflag [#allocation4], 1
    %523 = vsyncpa %s522, 1

</llo_original>
